<compile_context>
chip_gen: v6e
topology: v6e:2x2x1
jax: 0.10.0
libtpu: 0.0.40
codegen_flags: <defaults>
</compile_context>

<pallas_src>
import functools

import jax
import jax.numpy as jnp
from jax import lax
from jax.experimental import pallas as pl
from jax.experimental.pallas import tpu as pltpu


def _mse_kernel(x_ref, y_ref, acc_ref, *, rows_valid, block_rows, acc_rows, ragged):
    """Accumulate sum((x - y)^2) of this (block_rows, C) tile into the resident
    (acc_rows, C) f32 accumulator block owned by grid axis 0 (the core split)."""
    i = pl.program_id(1)

    @pl.when(i == 0)
    def _():
        acc_ref[...] = jnp.zeros_like(acc_ref)

    # Upcast BEFORE the subtraction so bf16/fp16 inputs keep full precision
    # (and move half the HBM bytes when the caller already holds bf16).
    d = x_ref[...].astype(jnp.float32) - y_ref[...].astype(jnp.float32)
    dsq = d * d

    def _fold(v):
        # Relayout-free reshape (regroups whole sublane tiles); the leading-axis
        # sum is VPU-only adds in acc_rows//8 independent chains per lane tile.
        if block_rows == acc_rows:
            return v
        return v.reshape(block_rows // acc_rows, acc_rows, v.shape[-1]).sum(axis=0)

    if not ragged:
        acc_ref[...] += _fold(dsq)
    else:
        # Only the final block can be partial: scalar row bound on the scalar
        # unit, maskless fast path for full blocks.
        block_idx = pl.program_id(0) * pl.num_programs(1) + i
        bound = rows_valid - block_idx * block_rows

        @pl.when(bound >= block_rows)
        def _():
            acc_ref[...] += _fold(dsq)

        @pl.when(bound < block_rows)
        def _():
            rows = lax.broadcasted_iota(jnp.int32, (block_rows, 1), 0)
            acc_ref[...] += _fold(jnp.where(rows < bound, dsq, 0.0))


def mse_loss_pallas(x, y, *, target_block_bytes=1 << 20):
    """mean((x - y)**2) over all elements, computed with a Pallas TPU kernel."""
    assert x.shape == y.shape
    total = int(x.size)
    C = int(x.shape[-1])

    # Layout-free collapse of the leading dims only (minor dim untouched, so no
    # HBM relayout copy in front of the bandwidth-bound kernel).
    x2 = x.reshape(-1, C)
    y2 = y.reshape(-1, C)
    R = int(x2.shape[0])

    itemsize = int(jnp.dtype(x.dtype).itemsize)
    rows_fit = max(32, (target_block_bytes // (C * itemsize)) // 32 * 32)

    if R <= rows_fit:
        # Single block covering the whole (R, C) slab; accumulator == block.
        block_rows, acc_rows, n_blocks = R, R, 1
    else:
        block_rows, acc_rows = rows_fit, 32
        n_blocks = pl.cdiv(R, block_rows)

    ragged = (R % block_rows) != 0

    # 2-way split across TensorCores (v7x megacore) only when there is plenty
    # of work and the blocks divide evenly (no redundant clamped-block reads);
    # single-TC chips (v5e/v6e) just see a harmless size-1 parallel axis.
    num_splits = 2 if (n_blocks >= 8 and n_blocks % 2 == 0) else 1
    steps = n_blocks // num_splits

    kernel = functools.partial(
        _mse_kernel,
        rows_valid=R,
        block_rows=block_rows,
        acc_rows=acc_rows,
        ragged=ragged,
    )

    partials = pl.pallas_call(
        kernel,
        out_shape=jax.ShapeDtypeStruct((num_splits * acc_rows, C), jnp.float32),
        grid_spec=pltpu.PrefetchScalarGridSpec(
            num_scalar_prefetch=0,
            grid=(num_splits, steps),
            in_specs=[
                pl.BlockSpec((block_rows, C), lambda p, i: (p * steps + i, 0)),
                pl.BlockSpec((block_rows, C), lambda p, i: (p * steps + i, 0)),
            ],
            out_specs=pl.BlockSpec((acc_rows, C), lambda p, i: (p, 0)),
        ),
        compiler_params=pltpu.CompilerParams(
            dimension_semantics=("parallel", "arbitrary"),
        ),
        cost_estimate=pl.CostEstimate(
            flops=3 * total,
            transcendentals=0,
            bytes_accessed=2 * total * itemsize + 4 * num_splits * acc_rows * C,
        ),
    )(x2, y2)

    # Tiny final reduce + mean (over the true, unmasked element count).
    return jnp.sum(partials) / jnp.float32(total)


def tacotron2_loss_forward(
    mel,
    mel_postnet,
    duration_predicted,
    mel_target,
    duration_predictor_target,
    volume_velocity_target,
    volume_velocity_predicted,
    matrix_A_target,
    matrix_A_predict,
    matrix_B_target,
    matrix_B_predict,
):
    """Faithful port of Tacotron2Loss.forward: only mel_loss is computed,
    the other five returned losses are the constant 0 (matching PyTorch)."""
    mel_loss = mse_loss_pallas(mel, mel_target)
    mel_postnet_loss = 0
    duration_predictor_loss = 0
    volume_velocity_loss = 0
    matrix_A_loss = 0
    matrix_B_loss = 0
    return (
        mel_loss,
        mel_postnet_loss,
        duration_predictor_loss,
        volume_velocity_loss,
        matrix_A_loss,
        matrix_B_loss,
    )


if __name__ == "__main__":
    key = jax.random.PRNGKey(0)
    B, T, N_MEL = 2, 8, 32  # small shapes: batch=2, frames=8, mel bins=32
    SEQ = 8

    k = jax.random.split(key, 11)
    mel = jax.random.normal(k[0], (B, T, N_MEL), jnp.float32)
    mel_postnet = jax.random.normal(k[1], (B, T, N_MEL), jnp.float32)
    duration_predicted = jax.random.normal(k[2], (B, SEQ), jnp.float32)
    mel_target = jax.random.normal(k[3], (B, T, N_MEL), jnp.float32)
    duration_predictor_target = jax.random.normal(k[4], (B, SEQ), jnp.float32)
    volume_velocity_target = jax.random.normal(k[5], (B, T), jnp.float32)
    volume_velocity_predicted = jax.random.normal(k[6], (B, T), jnp.float32)
    matrix_A_target = jax.random.normal(k[7], (B, SEQ, T), jnp.float32)
    matrix_A_predict = jax.random.normal(k[8], (B, SEQ, T), jnp.float32)
    matrix_B_target = jax.random.normal(k[9], (B, SEQ, T), jnp.float32)
    matrix_B_predict = jax.random.normal(k[10], (B, SEQ, T), jnp.float32)

    losses = tacotron2_loss_forward(
        mel,
        mel_postnet,
        duration_predicted,
        mel_target,
        duration_predictor_target,
        volume_velocity_target,
        volume_velocity_predicted,
        matrix_A_target,
        matrix_A_predict,
        matrix_B_target,
        matrix_B_predict,
    )

    mel_loss = jax.block_until_ready(losses[0])

    # sanity check against plain-JAX reference (single-block path)
    ref = jnp.mean((mel - mel_target) ** 2)
    assert jnp.allclose(mel_loss, ref, rtol=1e-5, atol=1e-6), (mel_loss, ref)
    assert losses[1:] == (0, 0, 0, 0, 0)

    # extra coverage: multi-block + 2-way split + ragged-tail mask path
    kk = jax.random.split(jax.random.PRNGKey(1), 2)
    a = jax.random.normal(kk[0], (2, 900, 80), jnp.float32)  # Tacotron-like n_mel=80
    b = jax.random.normal(kk[1], (2, 900, 80), jnp.float32)
    got = jax.block_until_ready(mse_loss_pallas(a, b, target_block_bytes=64 * 1024))
    ref2 = jnp.mean((a - b) ** 2)
    assert jnp.allclose(got, ref2, rtol=1e-4, atol=1e-6), (got, ref2)

    # extra coverage: bf16 inputs (in-kernel f32 upcast before the subtraction)
    a16, b16 = a.astype(jnp.bfloat16), b.astype(jnp.bfloat16)
    got16 = jax.block_until_ready(mse_loss_pallas(a16, b16))
    ref16 = jnp.mean((a16.astype(jnp.float32) - b16.astype(jnp.float32)) ** 2)
    assert jnp.allclose(got16, ref16, rtol=2e-2, atol=1e-3), (got16, ref16)

    print("KERNEL_OK")
</pallas_src>

<mosaic_0001>
module attributes {stable_mosaic.version = 11 : i64} {
  func.func @_mse_kernel(%arg0: i32, %arg1: i32, %arg2: memref<16x32xf32, #tpu.memory_space<vmem>>, %arg3: memref<16x32xf32, #tpu.memory_space<vmem>>, %arg4: memref<16x32xf32, #tpu.memory_space<vmem>>) attributes {dimension_semantics = [#tpu.dimension_semantics<parallel>, #tpu.dimension_semantics<arbitrary>], iteration_bounds = array<i64: 1, 1>, scalar_prefetch = 0 : i64, scratch_operands = 0 : i64, tpu.core_type = #tpu.core_type<tc>, window_params = [{transform_indices = @transform_0, window_bounds = array<i64: 16, 32>}, {transform_indices = @transform_1, window_bounds = array<i64: 16, 32>}, {transform_indices = @transform_2, window_bounds = array<i64: 16, 32>}]} {
    %c0_i32 = arith.constant 0 : i32
    %0 = arith.cmpi eq, %arg1, %c0_i32 : i32
    %1 = arith.extui %0 : i1 to i32
    %c0_i32_0 = arith.constant 0 : i32
    %2 = arith.cmpi ne, %1, %c0_i32_0 : i32
    scf.if %2 {
      %cst = arith.constant 0.000000e+00 : f32
      %10 = vector.broadcast %cst : f32 to vector<16x32xf32>
      %c0_8 = arith.constant 0 : index
      %c0_9 = arith.constant 0 : index
      %11 = vector.load %arg4[%c0_8, %c0_9] : memref<16x32xf32, #tpu.memory_space<vmem>>, vector<16x32xf32>
      tpu.vector_store %arg4[%c0_8, %c0_9], %10 {strides = array<i32>} : memref<16x32xf32, #tpu.memory_space<vmem>>, vector<16x32xf32>,
    } else {
    }
    %c0 = arith.constant 0 : index
    %c0_1 = arith.constant 0 : index
    %3 = vector.load %arg2[%c0, %c0_1] : memref<16x32xf32, #tpu.memory_space<vmem>>, vector<16x32xf32>
    %c0_2 = arith.constant 0 : index
    %c0_3 = arith.constant 0 : index
    %4 = vector.load %arg3[%c0_2, %c0_3] : memref<16x32xf32, #tpu.memory_space<vmem>>, vector<16x32xf32>
    %5 = arith.subf %3, %4 : vector<16x32xf32>
    %6 = arith.mulf %5, %5 : vector<16x32xf32>
    %c0_4 = arith.constant 0 : index
    %c0_5 = arith.constant 0 : index
    %7 = vector.load %arg4[%c0_4, %c0_5] : memref<16x32xf32, #tpu.memory_space<vmem>>, vector<16x32xf32>
    %8 = arith.addf %7, %6 : vector<16x32xf32>
    %c0_6 = arith.constant 0 : index
    %c0_7 = arith.constant 0 : index
    %9 = vector.load %arg4[%c0_6, %c0_7] : memref<16x32xf32, #tpu.memory_space<vmem>>, vector<16x32xf32>
    tpu.vector_store %arg4[%c0_6, %c0_7], %8 {strides = array<i32>} : memref<16x32xf32, #tpu.memory_space<vmem>>, vector<16x32xf32>,
    return
  }
  func.func @transform_0(%arg0: i32, %arg1: i32) -> (i32, i32) {
    %c1_i32 = arith.constant 1 : i32
    %0 = arith.muli %arg0, %c1_i32 : i32
    %1 = arith.addi %0, %arg1 : i32
    %c0_i32 = arith.constant 0 : i32
    %c0_i32_0 = arith.constant 0 : i32
    return %1, %c0_i32 : i32, i32
  }
  func.func @transform_1(%arg0: i32, %arg1: i32) -> (i32, i32) {
    %c1_i32 = arith.constant 1 : i32
    %0 = arith.muli %arg0, %c1_i32 : i32
    %1 = arith.addi %0, %arg1 : i32
    %c0_i32 = arith.constant 0 : i32
    %c0_i32_0 = arith.constant 0 : i32
    return %1, %c0_i32 : i32, i32
  }
  func.func @transform_2(%arg0: i32, %arg1: i32) -> (i32, i32) {
    %c0_i32 = arith.constant 0 : i32
    %c0_i32_0 = arith.constant 0 : i32
    return %arg0, %c0_i32 : i32, i32
  }
}

</mosaic_0001>

<llo_original>
// kernel: tpu_custom_call.1
$region0: #{tpu_custom_call.1}
  #allocation0 [shape = 'u32[]', space=smem, size = 0x4, offset = 0x4, fixed_abs, tag = 'smem constant byte address 0x4 - core index']
  #allocation1 [shape = 'u32[144,128]{1,0:T(1,128)}', space=vmem, size = 0x12000, scoped, tag = 'internal scratch']
  %s0 = inlined_call_operand.hbm [shape: f32[16,32], index: 0, kind: input, shape index: {}]
  %s1 = inlined_call_operand.hbm [shape: f32[16,32], index: 1, kind: input, shape index: {}]
  %s2 = inlined_call_operand.hbm [shape: f32[16,32], index: 2, kind: output, shape index: {}]
  %s3 = sld [smem:[#allocation0]]
  $region30: #{tpu_custom_call.1} parent=0
    _
  %s5 = ssub.s32 1, %s3
  %s6 = scalar_select 0, %s5, %s3
  $region1: #{tpu_custom_call.1} parent=0
    #allocation2 [shape = 'u8[8192]{0}', space=vmem, size = 0x2000, scoped, tag = 'input window, operand 0, single buffered']
    #allocation3 [shape = 's32[1]{0}', space=sflag, size = 0x4, scoped, tag = 'scoped memory for tpu_custom_call.1']
    #allocation4 [shape = 's32[1]{0}', space=sflag, size = 0x4, scoped, tag = 'scoped memory for tpu_custom_call.1']
    #allocation5 [shape = 'u8[8192]{0}', space=vmem, size = 0x2000, scoped, tag = 'input window, operand 1, single buffered']
    #allocation6 [shape = 's32[1]{0}', space=sflag, size = 0x4, scoped, tag = 'scoped memory for tpu_custom_call.1']
    #allocation7 [shape = 'u8[8192]{0}', space=vmem, size = 0x2000, scoped, tag = 'output window, operand 0, single buffered']
    %7 = vsyncpa [#allocation3], 0
    %8 = vsyncpa [#allocation6], 0
    %9 = vsyncpa [#allocation4], 0
    // Predicated region
    $region2: #{tpu_custom_call.1} parent=1 // pred_check
      _
    $region3: #{tpu_custom_call.1} parent=1 // pred_check_branch
      %11 = sbr.rel (0) target = $region5
    $region4: #{tpu_custom_call.1} parent=1 // pred_region
      %s12 = sadd.s32 0, 0
      %s13 = smul.u32 2, %s12
      %s15 = ssub.s32 256, 256
      %16 = vsyncadd [#allocation3], %s15
      %s17 = smul.addr %s13, 128
      %s18 = scalar_lea.hbm %s0, %s17
      %s19 = sshll.u32 [#allocation2], 4
      %s20 = int_to_ptr.vmem [resolvable:$true] %s19
      %25 = dma.hbm_to_vmem [thread:$0]  %s18, 256, %s20, [#allocation3], 128, 128, 8
    $region5: #{tpu_custom_call.1} parent=1 // pred_fallthru
      _
    // Predicated region
    $region6: #{tpu_custom_call.1} parent=1 // pred_check
      _
    $region7: #{tpu_custom_call.1} parent=1 // pred_check_branch
      %27 = sbr.rel (0) target = $region9
    $region8: #{tpu_custom_call.1} parent=1 // pred_region
      %s28 = sadd.s32 0, 0
      %s29 = smul.u32 2, %s28
      %s31 = ssub.s32 256, 256
      %32 = vsyncadd [#allocation6], %s31
      %s33 = smul.addr %s29, 128
      %s34 = scalar_lea.hbm %s1, %s33
      %s35 = sshll.u32 [#allocation5], 4
      %s36 = int_to_ptr.vmem [resolvable:$true] %s35
      %41 = dma.hbm_to_vmem [thread:$0]  %s34, 256, %s36, [#allocation6], 128, 128, 8
    $region9: #{tpu_custom_call.1} parent=1 // pred_fallthru
      _
    // Predicated region
    $region10: #{tpu_custom_call.1} parent=1 // pred_check
      _
    $region11: #{tpu_custom_call.1} parent=1 // pred_check_branch
      %43 = sbr.rel (0) target = $region13
    $region12: #{tpu_custom_call.1} parent=1 // pred_region
      %44 = dma.done [#allocation3], 256
    $region13: #{tpu_custom_call.1} parent=1 // pred_fallthru
      _
    // Predicated region
    $region14: #{tpu_custom_call.1} parent=1 // pred_check
      _
    $region15: #{tpu_custom_call.1} parent=1 // pred_check_branch
      %46 = sbr.rel (0) target = $region17
    $region16: #{tpu_custom_call.1} parent=1 // pred_region
      %47 = dma.done [#allocation6], 256
    $region17: #{tpu_custom_call.1} parent=1 // pred_fallthru
      _
    %s48 = sadd.s32 0, 0
    %s49 = smul.u32 2, %s48
    %s50 = sadd.s32 0, 0
    %s51 = smul.u32 2, %s50
    %p52 = scmp.eq.s32.totalorder 0, 0
    // Predicated region
    $region18: #{tpu_custom_call.1} parent=1 // pred_check
      %p53 = pneg %p52
    $region19: #{tpu_custom_call.1} parent=1 // pred_check_branch
      %55 = sbr.rel (%p53) target = $region21
    $region20: #{tpu_custom_call.1} parent=1 // pred_region
      %vm56 = vcmask 261120
      %57 = vst.msk [vmem:[#allocation7] sm:$0xff] %vm56, 0.0
      %58 = vst.msk [vmem:[#allocation7 + $0x8] sm:$0xff] %vm56, 0.0
    $region21: #{tpu_custom_call.1} parent=1 // pred_fallthru
      _
    %v59 = vld [vmem:[#allocation2] sm:$0xff]
    %v60 = vld [vmem:[#allocation2 + $0x8] sm:$0xff]
    %v61 = vld [vmem:[#allocation5] sm:$0xff]
    %v62 = vld [vmem:[#allocation5 + $0x8] sm:$0xff]
    %v63 = vsub.f32 %v59, %v61
    %v64 = vsub.f32 %v60, %v62
    %v65 = vmul.f32 %v63, %v63
    %v66 = vmul.f32 %v64, %v64
    %v67 = vld [vmem:[#allocation7] sm:$0xff]
    %v68 = vld [vmem:[#allocation7 + $0x8] sm:$0xff]
    %v69 = vadd.f32 %v67, %v65
    %v70 = vadd.f32 %v68, %v66
    %vm71 = vcmask 261120
    %72 = vst.msk [vmem:[#allocation7] sm:$0xff] %vm71, %v69
    %73 = vst.msk [vmem:[#allocation7 + $0x8] sm:$0xff] %vm71, %v70
    // Predicated region
    $region22: #{tpu_custom_call.1} parent=1 // pred_check
      _
    $region23: #{tpu_custom_call.1} parent=1 // pred_check_branch
      %75 = sbr.rel (0) target = $region25
    $region24: #{tpu_custom_call.1} parent=1 // pred_region
      %s77 = ssub.s32 256, 256
      %78 = vsyncadd [#allocation4], %s77
      %s79 = sshll.u32 [#allocation7], 4
      %s80 = int_to_ptr.vmem [resolvable:$true] %s79
      %85 = dma.vmem_to_hbm [thread:$0]  %s80, 256, %s2, [#allocation4], 128, 128, 8
    $region25: #{tpu_custom_call.1} parent=1 // pred_fallthru
      _
    // Predicated region
    $region26: #{tpu_custom_call.1} parent=1 // pred_check
      _
    $region27: #{tpu_custom_call.1} parent=1 // pred_check_branch
      %87 = sbr.rel (0) target = $region29
    $region28: #{tpu_custom_call.1} parent=1 // pred_region
      %88 = dma.done [#allocation4], 256
    $region29: #{tpu_custom_call.1} parent=1 // pred_fallthru
      _
    %89 = vsyncpa [#allocation3], 1
    %90 = vsyncpa [#allocation6], 1
    %91 = vsyncpa [#allocation4], 1

</llo_original>
